<compile_context>
chip_gen: v5e
topology: v5e:2x2
jax: 0.10.0
libtpu: 0.0.40
codegen_flags: <defaults>
</compile_context>

<pallas_src>
import functools

import jax
import jax.numpy as jnp
from jax.experimental import pallas as pl
from jax.experimental.pallas import tpu as pltpu

LANES = 128      # lane width: in_features / out_features padded to this
SUBLANES = 8     # sublane width: batch padded up to a multiple of this


def _dict_dense_kernel(choice_ref, x_ref, w_ref, o_ref):
    # choice_ref: (1,)           int32 in SMEM -- which weight matrix to use
    # x_ref:      (Np, 128)      f32 in VMEM   -- zero-padded input tile
    # w_ref:      (3, 128, 128)  f32 in VMEM   -- zero-padded stacked weights
    # o_ref:      (Np, 128)      f32 in VMEM   -- lane-dense output tile
    c = choice_ref[0]
    w = w_ref[c]  # dynamic select along the (untiled) leading axis
    o_ref[...] = jnp.dot(
        x_ref[...], w, preferred_element_type=jnp.float32
    ).astype(o_ref.dtype)


@functools.partial(jax.jit, static_argnames=("out_features",))
def _dict_dense_forward(x, w_stack, choice_idx, *, out_features):
    n, k_in = x.shape
    n_pad = SUBLANES * ((n + SUBLANES - 1) // SUBLANES)
    # Zero-pad x to an (8·?, 128)-aligned tile; padded rows/lanes contribute 0
    # to the dot because the padded weight rows are also 0.
    x_pad = jnp.zeros((n_pad, LANES), x.dtype).at[:n, :k_in].set(x)
    choice = jnp.asarray(choice_idx, dtype=jnp.int32).reshape((1,))

    out_pad = pl.pallas_call(
        _dict_dense_kernel,
        out_shape=jax.ShapeDtypeStruct((n_pad, LANES), jnp.float32),
        in_specs=[
            pl.BlockSpec(memory_space=pltpu.MemorySpace.SMEM),   # choice scalar
            pl.BlockSpec(memory_space=pltpu.MemorySpace.VMEM),   # x tile
            pl.BlockSpec(memory_space=pltpu.MemorySpace.VMEM),   # stacked weights
        ],
        out_specs=pl.BlockSpec(memory_space=pltpu.MemorySpace.VMEM),
    )(choice, x_pad, w_stack)

    # Strip padding back to the torch.mm output shape (n, out_features).
    return out_pad[:n, :out_features]


class MyDictDense:
    """JAX/Pallas port of the PyTorch MyDictDense module."""

    _names = ("linear1", "linear2", "linear3")

    def __init__(self, key):
        k1, k2, k3 = jax.random.split(key, 3)
        # randn-style init matching the PyTorch shapes (values will not
        # bit-match torch.randn; expected, not a kernel issue).
        self.params = {
            "linear1": jax.random.normal(k1, (4, 4), dtype=jnp.float32),
            "linear2": jax.random.normal(k2, (4, 1), dtype=jnp.float32),
            "linear3": jax.random.normal(k3, (4, 2), dtype=jnp.float32),
        }
        # One (3, 128, 128) zero-padded slab: uniform shape for every choice.
        w_stack = jnp.zeros((len(self._names), LANES, LANES), jnp.float32)
        for i, name in enumerate(self._names):
            w = self.params[name]
            w_stack = w_stack.at[i, : w.shape[0], : w.shape[1]].set(w)
        self.w_stack = w_stack

    def __call__(self, x, choice="linear1"):
        idx = self._names.index(choice)
        out_features = self.params[choice].shape[1]
        return _dict_dense_forward(x, self.w_stack, idx, out_features=out_features)


if __name__ == "__main__":
    key = jax.random.PRNGKey(0)
    pkey, xkey = jax.random.split(key)

    model = MyDictDense(pkey)

    # Small example input consistent with the module: (batch=2, in_features=4)
    x = jax.random.normal(xkey, (2, 4), dtype=jnp.float32)

    # Run all three choices through the single Pallas kernel.
    outs = {name: model(x, choice=name) for name in model._names}
    for out in outs.values():
        jax.block_until_ready(out)

    # Correctness check against plain JAX matmul (== torch.mm semantics).
    for name, out in outs.items():
        ref = x @ model.params[name]
        assert out.shape == ref.shape, (name, out.shape, ref.shape)
        assert jnp.allclose(out, ref, atol=1e-5, rtol=1e-5), name

    print("KERNEL_OK")
</pallas_src>

<mosaic_0001>
module attributes {stable_mosaic.version = 11 : i64} {
  func.func @_dict_dense_kernel(%arg0: memref<1xi32, #tpu.memory_space<smem>>, %arg1: memref<8x128xf32, #tpu.memory_space<vmem>>, %arg2: memref<3x128x128xf32, #tpu.memory_space<vmem>>, %arg3: memref<8x128xf32, #tpu.memory_space<vmem>>) attributes {dimension_semantics = [], scalar_prefetch = 0 : i64, scratch_operands = 0 : i64, tpu.core_type = #tpu.core_type<tc>} {
    %c0 = arith.constant 0 : index
    %0 = memref.load %arg0[%c0] : memref<1xi32, #tpu.memory_space<smem>>
    %1 = arith.index_cast %0 : i32 to index
    %c0_0 = arith.constant 0 : index
    %c0_1 = arith.constant 0 : index
    %2 = vector.load %arg2[%1, %c0_0, %c0_1] : memref<3x128x128xf32, #tpu.memory_space<vmem>>, vector<1x128x128xf32>
    %3 = vector.shape_cast %2 : vector<1x128x128xf32> to vector<128x128xf32>
    %c0_2 = arith.constant 0 : index
    %c0_3 = arith.constant 0 : index
    %4 = vector.load %arg1[%c0_2, %c0_3] : memref<8x128xf32, #tpu.memory_space<vmem>>, vector<8x128xf32>
    %cst = arith.constant dense<0.000000e+00> : vector<8x128xf32>
    %5 = tpu.matmul %4, %3, %cst {dimension_numbers = #tpu.dot_dimension_numbers<[1], [0], [0], [1], [0, 0, 1, 1], [], []>} : vector<8x128xf32>, vector<128x128xf32>, vector<8x128xf32> -> vector<8x128xf32>
    %c0_4 = arith.constant 0 : index
    %c0_5 = arith.constant 0 : index
    %6 = vector.load %arg3[%c0_4, %c0_5] : memref<8x128xf32, #tpu.memory_space<vmem>>, vector<8x128xf32>
    tpu.vector_store %arg3[%c0_4, %c0_5], %5 {strides = array<i32>} : memref<8x128xf32, #tpu.memory_space<vmem>>, vector<8x128xf32>,
    return
  }
}

</mosaic_0001>

<llo_original>
// kernel: _dict_dense_forward.1
$region0: #{_dict_dense_forward.1}
  #allocation0 [shape = 'u32[]', space=smem, size = 0x4, offset = 0x4, fixed_abs, tag = 'smem constant byte address 0x4 - core index']
  #allocation1 [shape = 'u32[72,128]{1,0:T(1,128)}', space=vmem, size = 0x9000, scoped, tag = 'internal scratch']
  #allocation2 [shape = 's32[1]{0:T(128)S(6)}', space=smem, size = 0x200, scoped, tag = 'scoped memory for _dict_dense_forward.1']
  %s0 = inlined_call_operand.<no memory space> [shape: s32[1], index: 0, kind: input, shape index: {}]
  %s1 = inlined_call_operand.vmem [shape: f32[8,128], index: 1, kind: input, shape index: {}]
  %s2 = inlined_call_operand.hbm [shape: f32[3,128,128], index: 2, kind: input, shape index: {}]
  %s3 = inlined_call_operand.vmem [shape: f32[8,128], index: 3, kind: output, shape index: {}]
  %s4 = sld [smem:[#allocation0]]
  $region26: #{_dict_dense_forward.1} parent=0
    _
  %s6 = ssub.s32 1, %s4
  %s7 = scalar_select 0, %s6, %s4
  %8 = sst [smem:[#allocation2]] %s0
  $region1: #{_dict_dense_forward.1} parent=0
    #allocation3 [shape = 'u8[196608]{0}', space=vmem, size = 0x30000, scoped, tag = 'input window, operand 2, single buffered']
    #allocation4 [shape = 's32[1]{0}', space=sflag, size = 0x4, scoped, tag = 'scoped memory for _dict_dense_forward.1']
    %9 = vsyncpa [#allocation4], 0
    // Predicated region
    $region2: #{_dict_dense_forward.1} parent=1 // pred_check
      _
    $region3: #{_dict_dense_forward.1} parent=1 // pred_check_branch
      %11 = sbr.rel (0) target = $region5
    $region4: #{_dict_dense_forward.1} parent=1 // pred_region
      _
    $region5: #{_dict_dense_forward.1} parent=1 // pred_fallthru
      _
    // Predicated region
    $region6: #{_dict_dense_forward.1} parent=1 // pred_check
      _
    $region7: #{_dict_dense_forward.1} parent=1 // pred_check_branch
      %13 = sbr.rel (0) target = $region9
    $region8: #{_dict_dense_forward.1} parent=1 // pred_region
      _
    $region9: #{_dict_dense_forward.1} parent=1 // pred_fallthru
      _
    // Predicated region
    $region10: #{_dict_dense_forward.1} parent=1 // pred_check
      _
    $region11: #{_dict_dense_forward.1} parent=1 // pred_check_branch
      %15 = sbr.rel (0) target = $region13
    $region12: #{_dict_dense_forward.1} parent=1 // pred_region
      %17 = vsyncadd [#allocation4], 0
      %s18 = sshll.u32 %s2, 4
      %s19 = int_to_ptr.hbm [resolvable:$true] %s18
      %s20 = sshll.u32 [#allocation3], 4
      %s21 = int_to_ptr.vmem [resolvable:$true] %s20
      %26 = dma.hbm_to_vmem [thread:$0]  %s19, 6144, %s21, [#allocation4], 128, 128, 8
    $region13: #{_dict_dense_forward.1} parent=1 // pred_fallthru
      _
    // Predicated region
    $region14: #{_dict_dense_forward.1} parent=1 // pred_check
      _
    $region15: #{_dict_dense_forward.1} parent=1 // pred_check_branch
      %28 = sbr.rel (0) target = $region17
    $region16: #{_dict_dense_forward.1} parent=1 // pred_region
      %30 = dma.done [#allocation4], 6144
    $region17: #{_dict_dense_forward.1} parent=1 // pred_fallthru
      _
    %s31 = sld [smem:[#allocation2]]
    %s32 = smul.u32 %s31, 128
    %s33 = scalar_lea.vmem [#allocation3], %s32
    %v34 = vld [vmem:[%s33] sm:$0xff]
    %v35 = vld [vmem:[%s33 + $0x8] sm:$0xff]
    %v36 = vld [vmem:[%s33 + $0x10] sm:$0xff]
    %v37 = vld [vmem:[%s33 + $0x18] sm:$0xff]
    %v38 = vld [vmem:[%s33 + $0x20] sm:$0xff]
    %v39 = vld [vmem:[%s33 + $0x28] sm:$0xff]
    %v40 = vld [vmem:[%s33 + $0x30] sm:$0xff]
    %v41 = vld [vmem:[%s33 + $0x38] sm:$0xff]
    %v42 = vld [vmem:[%s33 + $0x40] sm:$0xff]
    %v43 = vld [vmem:[%s33 + $0x48] sm:$0xff]
    %v44 = vld [vmem:[%s33 + $0x50] sm:$0xff]
    %v45 = vld [vmem:[%s33 + $0x58] sm:$0xff]
    %v46 = vld [vmem:[%s33 + $0x60] sm:$0xff]
    %v47 = vld [vmem:[%s33 + $0x68] sm:$0xff]
    %v48 = vld [vmem:[%s33 + $0x70] sm:$0xff]
    %v49 = vld [vmem:[%s33 + $0x78] sm:$0xff]
    %v50 = vld [vmem:[%s1] sm:$0xff]
    %51 = vmatpush.msra.mxu0 %v49
    %52 = vmatpush.msra.mxu0 %v48
    %53 = vmatpush.msra.mxu0 %v47
    %54 = vmatpush.msra.mxu0 %v46
    %55 = vmatpush.msra.mxu0 %v45
    %56 = vmatpush.msra.mxu0 %v44
    %57 = vmatpush.msra.mxu0 %v43
    %58 = vmatpush.msra.mxu0 %v42
    %59 = vmatpush.msra.mxu0 %v41
    %60 = vmatpush.msra.mxu0 %v40
    %61 = vmatpush.msra.mxu0 %v39
    %62 = vmatpush.msra.mxu0 %v38
    %63 = vmatpush.msra.mxu0 %v37
    %64 = vmatpush.msra.mxu0 %v36
    %65 = vmatpush.msra.mxu0 %v35
    %66 = vmatpush.msra.mxu0 %v34
    %67 = vmatmul.f32.gmra.mxu0 %v50
    %v68 = vpop.f32.mrf.mxu0
    %v69 = vadd.f32 0.0, %v68
    %70 = vdwg.mxu0
    %71 = vst [vmem:[%s3] sm:$0xff] %v69
    // Predicated region
    $region18: #{_dict_dense_forward.1} parent=1 // pred_check
      _
    $region19: #{_dict_dense_forward.1} parent=1 // pred_check_branch
      %73 = sbr.rel (0) target = $region21
    $region20: #{_dict_dense_forward.1} parent=1 // pred_region
      _
    $region21: #{_dict_dense_forward.1} parent=1 // pred_fallthru
      _
    // Predicated region
    $region22: #{_dict_dense_forward.1} parent=1 // pred_check
      _
    $region23: #{_dict_dense_forward.1} parent=1 // pred_check_branch
      %75 = sbr.rel (0) target = $region25
    $region24: #{_dict_dense_forward.1} parent=1 // pred_region
      _
    $region25: #{_dict_dense_forward.1} parent=1 // pred_fallthru
      _
    %76 = vsyncpa [#allocation4], 1

</llo_original>
